<compile_context>
chip_gen: v6e
topology: v6e:2x2x1
jax: 0.10.0
libtpu: 0.0.40
codegen_flags: <defaults>
</compile_context>

<pallas_src>
import math

import jax
import jax.numpy as jnp
import numpy as np
from jax.experimental import pallas as pl
from jax.experimental.pallas import tpu as pltpu


# ------------------------- fixed sinusoidal embedding tables -------------------------

def fixed_embedding_table(c_in, d_model):
    position = jnp.arange(c_in, dtype=jnp.float32)[:, None]
    div_term = jnp.exp(
        jnp.arange(0, d_model, 2, dtype=jnp.float32) * -(math.log(10000.0) / d_model)
    )
    w = jnp.zeros((c_in, d_model), jnp.float32)
    w = w.at[:, 0::2].set(jnp.sin(position * div_term))
    w = w.at[:, 1::2].set(jnp.cos(position * div_term))
    return w


# Fused temporal table layout (freq='h'): [hour | weekday | day | month | zero pad]
_HOUR, _WDAY, _DAY, _MONTH = 24, 7, 32, 13
_OFF_HOUR = 0
_OFF_WDAY = _OFF_HOUR + _HOUR        # 24
_OFF_DAY = _OFF_WDAY + _WDAY         # 31
_OFF_MONTH = _OFF_DAY + _DAY         # 63
_TTAB_ROWS = 128                     # 76 used rows, zero-padded to a full K=128


# ------------------------------------ Pallas kernel -----------------------------------

def _data_embedding_kernel(x_ref, mark_ref, w_ref, ttab_ref, o_ref):
    # x_ref:    (tm, 3C)  f32  im2col'd tokens [x[t-1] | x[t] | x[t+1]] (circular)
    # mark_ref: (tm, 4)   i32  marks with per-field row offsets already applied
    # w_ref:    (3C, D)   f32  stacked conv taps [w0; w1; w2]
    # ttab_ref: (128, D)  f32  fused fixed temporal table (zero-padded rows)
    # o_ref:    (tm, D)   f32
    tm = o_ref.shape[0]

    # --- TokenEmbedding: one MXU matmul (im2col over K, no in-kernel shifts) ---
    val = jnp.dot(x_ref[...], w_ref[...], preferred_element_type=jnp.float32)

    # --- TemporalEmbedding: multi-hot (tm,128) @ (128,D) matmul ---
    marks = mark_ref[...]                                         # (tm, 4) int32
    iota = jax.lax.broadcasted_iota(jnp.int32, (tm, ttab_ref.shape[0]), 1)
    mh = ((marks[:, 0:1] == iota) | (marks[:, 1:2] == iota)
          | (marks[:, 2:3] == iota) | (marks[:, 3:4] == iota)
          ).astype(jnp.float32)                                   # disjoint row ranges
    temporal = jnp.dot(mh, ttab_ref[...], preferred_element_type=jnp.float32)

    # Dropout(p=0.1) is identity at inference time.
    o_ref[...] = (val + temporal).astype(o_ref.dtype)


def _choose_tile_m(M, target=512):
    """Row-tile for the flattened M = B*L axis.

    target ~512 is the v7x-safe default (raise to 1024-2048 on v5e/v6e for large M).
    Ensures a multiple of 8 and >= 2 grid steps whenever M allows it (megacore)."""
    tm = min(target, M)
    if M > 8 and tm >= M:
        tm = (M // 2) // 8 * 8
    tm = max(8, (tm // 8) * 8)
    return tm


def data_embedding_wo_pos(x, x_mark, conv_w, hour_tab, wday_tab, day_tab, month_tab,
                          tile_m=512):
    """x: [B, L, C] f32; x_mark: [B, L, 4] i32 (month, day, weekday, hour);
    conv_w: [D, C, 3] f32 -> [B, L, D] f32."""
    B, L, C = x.shape
    D = conv_w.shape[0]
    M = B * L

    # --- im2col over K (circular, per-sequence) done in the wrapper on tiny data ---
    # out[t] = w0 @ x[(t-1)%L] + w1 @ x[t] + w2 @ x[(t+1)%L]
    x_taps = jnp.concatenate(
        [jnp.roll(x, 1, axis=1), x, jnp.roll(x, -1, axis=1)], axis=-1)   # (B, L, 3C)
    x2 = x_taps.reshape(M, 3 * C).astype(jnp.float32)

    # Stacked conv taps: (3C, D), rows [w0.T ; w1.T ; w2.T]
    w_k = jnp.concatenate(
        [conv_w[:, :, 0].T, conv_w[:, :, 1].T, conv_w[:, :, 2].T], axis=0)

    # Fuse the four fixed temporal tables into one zero-padded 128-row table.
    t_all = jnp.zeros((_TTAB_ROWS, D), jnp.float32)
    t_all = t_all.at[_OFF_HOUR:_OFF_HOUR + _HOUR].set(hour_tab)
    t_all = t_all.at[_OFF_WDAY:_OFF_WDAY + _WDAY].set(wday_tab)
    t_all = t_all.at[_OFF_DAY:_OFF_DAY + _DAY].set(day_tab)
    t_all = t_all.at[_OFF_MONTH:_OFF_MONTH + _MONTH].set(month_tab)

    # x_mark columns are [month, day, weekday, hour]; add each field's row offset.
    mark_off = jnp.asarray([_OFF_MONTH, _OFF_DAY, _OFF_WDAY, _OFF_HOUR], jnp.int32)
    marks2 = (x_mark.astype(jnp.int32) + mark_off).reshape(M, 4)

    # --- tile the M axis; pad to a whole number of tiles ---
    tm = _choose_tile_m(M, tile_m)
    nb = pl.cdiv(M, tm)
    M_pad = nb * tm
    if M_pad != M:
        x2 = jnp.pad(x2, ((0, M_pad - M), (0, 0)))
        marks2 = jnp.pad(marks2, ((0, M_pad - M), (0, 0)))

    itemsize = 4
    cost = pl.CostEstimate(
        flops=2 * M_pad * (3 * C + _TTAB_ROWS) * D,
        transcendentals=0,
        bytes_accessed=(x2.size + marks2.size + w_k.size + t_all.size
                        + M_pad * D) * itemsize,
    )

    out = pl.pallas_call(
        _data_embedding_kernel,
        out_shape=jax.ShapeDtypeStruct((M_pad, D), jnp.float32),
        grid_spec=pltpu.PrefetchScalarGridSpec(
            num_scalar_prefetch=0,
            grid=(nb,),
            in_specs=[
                pl.BlockSpec((tm, 3 * C), lambda i: (i, 0)),     # im2col tokens
                pl.BlockSpec((tm, 4), lambda i: (i, 0)),         # marks (+offsets)
                pl.BlockSpec(w_k.shape, lambda i: (0, 0)),       # conv taps (resident)
                pl.BlockSpec(t_all.shape, lambda i: (0, 0)),     # temporal table
            ],
            out_specs=pl.BlockSpec((tm, D), lambda i: (i, 0)),
        ),
        compiler_params=pltpu.CompilerParams(
            dimension_semantics=("parallel",),
            vmem_limit_bytes=32 * 1024 * 1024,
        ),
        cost_estimate=cost,
    )(x2, marks2, w_k, t_all)

    return out[:M].reshape(B, L, D)


# ----------------------------------- reference (JAX) ----------------------------------

def reference_forward(x, x_mark, conv_w, hour_tab, wday_tab, day_tab, month_tab):
    xt = jnp.transpose(x, (0, 2, 1))                                  # [B, C, L]
    xp = jnp.concatenate([xt[:, :, -1:], xt, xt[:, :, :1]], axis=-1)  # circular pad 1
    val = jax.lax.conv_general_dilated(
        xp, conv_w, window_strides=(1,), padding="VALID",
        dimension_numbers=("NCH", "OIH", "NCH"))
    val = jnp.transpose(val, (0, 2, 1))                               # [B, L, D]
    temporal = (hour_tab[x_mark[:, :, 3]] + wday_tab[x_mark[:, :, 2]]
                + day_tab[x_mark[:, :, 1]] + month_tab[x_mark[:, :, 0]])
    return val + temporal


# ---------------------------------------- main -----------------------------------------

if __name__ == "__main__":
    B, L, C_IN, D_MODEL = 2, 8, 4, 32

    key = jax.random.PRNGKey(0)
    kx, km, kw = jax.random.split(key, 3)

    x = jax.random.normal(kx, (B, L, C_IN), dtype=jnp.float32)

    # x_mark fields: [month(0..12), day(0..31), weekday(0..6), hour(0..23)]
    km_m, km_d, km_w, km_h = jax.random.split(km, 4)
    x_mark = jnp.stack([
        jax.random.randint(km_m, (B, L), 0, 13),
        jax.random.randint(km_d, (B, L), 0, 32),
        jax.random.randint(km_w, (B, L), 0, 7),
        jax.random.randint(km_h, (B, L), 0, 24),
    ], axis=-1).astype(jnp.int32)

    # Conv1d weight [d_model, c_in, 3], kaiming_normal_(fan_in, leaky_relu) ~ N(0, 2/fan_in)
    fan_in = C_IN * 3
    conv_w = jax.random.normal(kw, (D_MODEL, C_IN, 3), dtype=jnp.float32) * math.sqrt(2.0 / fan_in)

    # Fixed temporal embedding tables (freq='h': no minute table)
    hour_tab = fixed_embedding_table(24, D_MODEL)
    wday_tab = fixed_embedding_table(7, D_MODEL)
    day_tab = fixed_embedding_table(32, D_MODEL)
    month_tab = fixed_embedding_table(13, D_MODEL)

    out = data_embedding_wo_pos(x, x_mark, conv_w, hour_tab, wday_tab, day_tab, month_tab)
    out = jax.block_until_ready(out)

    ref = reference_forward(x, x_mark, conv_w, hour_tab, wday_tab, day_tab, month_tab)
    np.testing.assert_allclose(np.asarray(out), np.asarray(ref), rtol=1e-5, atol=1e-5)

    print("KERNEL_OK")
</pallas_src>

<mosaic_0001>
module attributes {stable_mosaic.version = 11 : i64} {
  func.func @_data_embedding_kernel(%arg0: i32, %arg1: memref<8x12xf32, #tpu.memory_space<vmem>>, %arg2: memref<8x4xi32, #tpu.memory_space<vmem>>, %arg3: memref<12x32xf32, #tpu.memory_space<vmem>>, %arg4: memref<128x32xf32, #tpu.memory_space<vmem>>, %arg5: memref<8x32xf32, #tpu.memory_space<vmem>>) attributes {dimension_semantics = [#tpu.dimension_semantics<parallel>], iteration_bounds = array<i64: 2>, scalar_prefetch = 0 : i64, scratch_operands = 0 : i64, tpu.core_type = #tpu.core_type<tc>, window_params = [{transform_indices = @transform_0, window_bounds = array<i64: 8, 12>}, {transform_indices = @transform_1, window_bounds = array<i64: 8, 4>}, {pipeline_mode = #tpu.pipeline_mode<synchronous>, transform_indices = @transform_2, window_bounds = array<i64: 12, 32>}, {pipeline_mode = #tpu.pipeline_mode<synchronous>, transform_indices = @transform_3, window_bounds = array<i64: 128, 32>}, {transform_indices = @transform_4, window_bounds = array<i64: 8, 32>}]} {
    %c0 = arith.constant 0 : index
    %c0_0 = arith.constant 0 : index
    %0 = vector.load %arg1[%c0, %c0_0] : memref<8x12xf32, #tpu.memory_space<vmem>>, vector<8x12xf32>
    %c0_1 = arith.constant 0 : index
    %c0_2 = arith.constant 0 : index
    %1 = vector.load %arg3[%c0_1, %c0_2] : memref<12x32xf32, #tpu.memory_space<vmem>>, vector<12x32xf32>
    %cst = arith.constant dense<0.000000e+00> : vector<8x32xf32>
    %2 = tpu.matmul %0, %1, %cst {dimension_numbers = #tpu.dot_dimension_numbers<[1], [0], [0], [1], [0, 0, 1, 1], [], []>} : vector<8x12xf32>, vector<12x32xf32>, vector<8x32xf32> -> vector<8x32xf32>
    %c0_3 = arith.constant 0 : index
    %c0_4 = arith.constant 0 : index
    %3 = vector.load %arg2[%c0_3, %c0_4] : memref<8x4xi32, #tpu.memory_space<vmem>>, vector<8x4xi32>
    %4 = tpu.iota {dimensions = array<i32: 1>} : vector<8x128xi32>
    %5 = vector.extract_strided_slice %3 {offsets = [0, 0], sizes = [8, 1], strides = [1, 1]} : vector<8x4xi32> to vector<8x1xi32>
    %6 = vector.broadcast %5 : vector<8x1xi32> to vector<8x128xi32>
    %7 = arith.cmpi eq, %6, %4 : vector<8x128xi32>
    %8 = vector.extract_strided_slice %3 {offsets = [0, 1], sizes = [8, 1], strides = [1, 1]} : vector<8x4xi32> to vector<8x1xi32>
    %9 = vector.broadcast %8 : vector<8x1xi32> to vector<8x128xi32>
    %10 = arith.cmpi eq, %9, %4 : vector<8x128xi32>
    %11 = arith.ori %7, %10 : vector<8x128xi1>
    %12 = vector.extract_strided_slice %3 {offsets = [0, 2], sizes = [8, 1], strides = [1, 1]} : vector<8x4xi32> to vector<8x1xi32>
    %13 = vector.broadcast %12 : vector<8x1xi32> to vector<8x128xi32>
    %14 = arith.cmpi eq, %13, %4 : vector<8x128xi32>
    %15 = arith.ori %11, %14 : vector<8x128xi1>
    %16 = vector.extract_strided_slice %3 {offsets = [0, 3], sizes = [8, 1], strides = [1, 1]} : vector<8x4xi32> to vector<8x1xi32>
    %17 = vector.broadcast %16 : vector<8x1xi32> to vector<8x128xi32>
    %18 = arith.cmpi eq, %17, %4 : vector<8x128xi32>
    %19 = arith.ori %15, %18 : vector<8x128xi1>
    %20 = arith.extui %19 : vector<8x128xi1> to vector<8x128xi32>
    %21 = arith.sitofp %20 : vector<8x128xi32> to vector<8x128xf32>
    %c0_5 = arith.constant 0 : index
    %c0_6 = arith.constant 0 : index
    %22 = vector.load %arg4[%c0_5, %c0_6] : memref<128x32xf32, #tpu.memory_space<vmem>>, vector<128x32xf32>
    %cst_7 = arith.constant dense<0.000000e+00> : vector<8x32xf32>
    %23 = tpu.matmul %21, %22, %cst_7 {dimension_numbers = #tpu.dot_dimension_numbers<[1], [0], [0], [1], [0, 0, 1, 1], [], []>} : vector<8x128xf32>, vector<128x32xf32>, vector<8x32xf32> -> vector<8x32xf32>
    %24 = arith.addf %2, %23 : vector<8x32xf32>
    %c0_8 = arith.constant 0 : index
    %c0_9 = arith.constant 0 : index
    %25 = vector.load %arg5[%c0_8, %c0_9] : memref<8x32xf32, #tpu.memory_space<vmem>>, vector<8x32xf32>
    tpu.vector_store %arg5[%c0_8, %c0_9], %24 {strides = array<i32>} : memref<8x32xf32, #tpu.memory_space<vmem>>, vector<8x32xf32>,
    return
  }
  func.func @transform_0(%arg0: i32) -> (i32, i32) {
    %c0_i32 = arith.constant 0 : i32
    %c0_i32_0 = arith.constant 0 : i32
    return %arg0, %c0_i32 : i32, i32
  }
  func.func @transform_1(%arg0: i32) -> (i32, i32) {
    %c0_i32 = arith.constant 0 : i32
    %c0_i32_0 = arith.constant 0 : i32
    return %arg0, %c0_i32 : i32, i32
  }
  func.func @transform_2(%arg0: i32) -> (i32, i32) {
    %c0_i32 = arith.constant 0 : i32
    %c0_i32_0 = arith.constant 0 : i32
    %c0_i32_1 = arith.constant 0 : i32
    return %c0_i32, %c0_i32_0 : i32, i32
  }
  func.func @transform_3(%arg0: i32) -> (i32, i32) {
    %c0_i32 = arith.constant 0 : i32
    %c0_i32_0 = arith.constant 0 : i32
    %c0_i32_1 = arith.constant 0 : i32
    return %c0_i32, %c0_i32_0 : i32, i32
  }
  func.func @transform_4(%arg0: i32) -> (i32, i32) {
    %c0_i32 = arith.constant 0 : i32
    %c0_i32_0 = arith.constant 0 : i32
    return %arg0, %c0_i32 : i32, i32
  }
}

</mosaic_0001>

<llo_original>
// kernel: tpu_custom_call.1
$region0: #{tpu_custom_call.1}
  #allocation0 [shape = 'u32[]', space=smem, size = 0x4, offset = 0x4, fixed_abs, tag = 'smem constant byte address 0x4 - core index']
  #allocation1 [shape = 'u32[144,128]{1,0:T(1,128)}', space=vmem, size = 0x12000, scoped, tag = 'internal scratch']
  %s0 = inlined_call_operand.vmem [shape: f32[16,12], index: 0, kind: input, shape index: {}]
  %s1 = inlined_call_operand.vmem [shape: s32[16,4], index: 1, kind: input, shape index: {}]
  %s2 = inlined_call_operand.vmem [shape: f32[12,32], index: 2, kind: input, shape index: {}]
  %s3 = inlined_call_operand.vmem [shape: f32[128,32], index: 3, kind: input, shape index: {}]
  %s4 = inlined_call_operand.hbm [shape: f32[16,32], index: 4, kind: output, shape index: {}]
  %s5 = sld [smem:[#allocation0]]
  $region49: #{tpu_custom_call.1} parent=0
    _
  %s7 = ssub.s32 1, %s5
  %s8 = scalar_select 0, %s7, %s5
  $region1: #{tpu_custom_call.1} parent=0
    #allocation2 [shape = 'u8[8192]{0}', space=vmem, size = 0x2000, scoped, tag = 'output window, operand 0']
    #allocation3 [shape = 's32[2]{0}', space=sflag, size = 0x8, scoped, tag = 'scoped memory for tpu_custom_call.1']
    %9 = vsyncpa [#allocation3], 0
    %s10 = scalar_lea.sflag [#allocation3], 1
    %11 = vsyncpa %s10, 0
    loop: start=0, step=1, limit=4
    $region2: #{tpu_custom_call.1} parent=1 // loop_pre_header
      _
    $region3: #{tpu_custom_call.1} parent=1 // loop_header
      %s13 = sphi 0, %s17
      %p14 = scmp.ge.s32.totalorder %s13, 4
      %s23 = sphi 0, %s25
      %s26 = sphi 0, %s23
      %s27 = sphi 0, %s26
      %s43 = sphi 0, %s27
      %s49 = sphi 0, %s51
      %s52 = sphi 0, %s49
      %s53 = sphi 0, %s52
      %s69 = sphi 0, %s53
      %s73 = sphi 0, %s73
      %s75 = sphi 0, %s73
      %s76 = sphi 0, %s75
      %s90 = sphi 0, %s76
      %s94 = sphi 0, %s94
      %s96 = sphi 0, %s94
      %s97 = sphi 0, %s96
      %s111 = sphi 0, %s97
      %s117 = sphi 0, %s119
      %s120 = sphi 0, %s117
      %s121 = sphi 0, %s120
      %s137 = sphi 0, %s121
    $region4: #{tpu_custom_call.1} parent=1 // loop_header_branch
      %16 = sbr.rel (%p14) target = $region8
    $region5: #{tpu_custom_call.1} parent=1 // loop_body
      %s18 = ssub.s32 %s13, 1
      %s19 = ssub.s32 %s13, 2
      %s20 = sadd.s32 %s13, 1
      %s21 = ssub.s32 %s13, %s20
      %p22 = scmp.eq.s32.totalorder %s21, 0
      %s24 = sadd.s32 %s23, 1
      %s25 = scalar_select %p22, %s23, %s24
      %p28 = pneg %p22
      %p29 = scmp.eq.s32.totalorder %s13, 1
      %p30 = por %p28, %p29
      %p31 = scmp.ne.s32.totalorder %s23, %s26
      %p32 = scmp.eq.s32.totalorder %s13, 0
      %p33 = por %p31, %p32
      %p34 = scmp.ne.s32.totalorder %s23, %s26
      %p35 = scmp.eq.s32.totalorder %s18, 1
      %p36 = por %p34, %p35
      %p37 = scmp.ne.s32.totalorder %s26, %s27
      %p38 = scmp.eq.s32.totalorder %s18, 0
      %p39 = por %p37, %p38
      %p40 = scmp.ne.s32.totalorder %s26, %s27
      %p41 = scmp.eq.s32.totalorder %s19, 1
      %p42 = por %p40, %p41
      %p44 = scmp.ne.s32.totalorder %s27, %s43
      %p45 = scmp.eq.s32.totalorder %s19, 0
      %p46 = por %p44, %p45
      %s47 = ssub.s32 %s13, %s20
      %p48 = scmp.eq.s32.totalorder %s47, 0
      %s50 = sadd.s32 %s49, 1
      %s51 = scalar_select %p48, %s49, %s50
      %p54 = pneg %p48
      %p55 = scmp.eq.s32.totalorder %s13, 1
      %p56 = por %p54, %p55
      %p57 = scmp.ne.s32.totalorder %s49, %s52
      %p58 = scmp.eq.s32.totalorder %s13, 0
      %p59 = por %p57, %p58
      %p60 = scmp.ne.s32.totalorder %s49, %s52
      %p61 = scmp.eq.s32.totalorder %s18, 1
      %p62 = por %p60, %p61
      %p63 = scmp.ne.s32.totalorder %s52, %s53
      %p64 = scmp.eq.s32.totalorder %s18, 0
      %p65 = por %p63, %p64
      %p66 = scmp.ne.s32.totalorder %s52, %s53
      %p67 = scmp.eq.s32.totalorder %s19, 1
      %p68 = por %p66, %p67
      %p70 = scmp.ne.s32.totalorder %s53, %s69
      %p71 = scmp.eq.s32.totalorder %s19, 0
      %p72 = por %p70, %p71
      %s74 = sadd.s32 %s73, 1
      %p77 = scmp.eq.s32.totalorder %s13, 1
      %p78 = scmp.ne.s32.totalorder %s73, %s75
      %p79 = scmp.eq.s32.totalorder %s13, 0
      %p80 = por %p78, %p79
      %p81 = scmp.ne.s32.totalorder %s73, %s75
      %p82 = scmp.eq.s32.totalorder %s18, 1
      %p83 = por %p81, %p82
      %p84 = scmp.ne.s32.totalorder %s75, %s76
      %p85 = scmp.eq.s32.totalorder %s18, 0
      %p86 = por %p84, %p85
      %p87 = scmp.ne.s32.totalorder %s75, %s76
      %p88 = scmp.eq.s32.totalorder %s19, 1
      %p89 = por %p87, %p88
      %p91 = scmp.ne.s32.totalorder %s76, %s90
      %p92 = scmp.eq.s32.totalorder %s19, 0
      %p93 = por %p91, %p92
      %s95 = sadd.s32 %s94, 1
      %p98 = scmp.eq.s32.totalorder %s13, 1
      %p99 = scmp.ne.s32.totalorder %s94, %s96
      %p100 = scmp.eq.s32.totalorder %s13, 0
      %p101 = por %p99, %p100
      %p102 = scmp.ne.s32.totalorder %s94, %s96
      %p103 = scmp.eq.s32.totalorder %s18, 1
      %p104 = por %p102, %p103
      %p105 = scmp.ne.s32.totalorder %s96, %s97
      %p106 = scmp.eq.s32.totalorder %s18, 0
      %p107 = por %p105, %p106
      %p108 = scmp.ne.s32.totalorder %s96, %s97
      %p109 = scmp.eq.s32.totalorder %s19, 1
      %p110 = por %p108, %p109
      %p112 = scmp.ne.s32.totalorder %s97, %s111
      %p113 = scmp.eq.s32.totalorder %s19, 0
      %p114 = por %p112, %p113
      %s115 = ssub.s32 %s13, %s20
      %p116 = scmp.eq.s32.totalorder %s115, 0
      %s118 = sadd.s32 %s117, 1
      %s119 = scalar_select %p116, %s117, %s118
      %p122 = pneg %p116
      %p123 = scmp.eq.s32.totalorder %s13, 1
      %p124 = por %p122, %p123
      %p125 = scmp.ne.s32.totalorder %s117, %s120
      %p126 = scmp.eq.s32.totalorder %s13, 0
      %p127 = por %p125, %p126
      %p128 = scmp.ne.s32.totalorder %s117, %s120
      %p129 = scmp.eq.s32.totalorder %s18, 1
      %p130 = por %p128, %p129
      %p131 = scmp.ne.s32.totalorder %s120, %s121
      %p132 = scmp.eq.s32.totalorder %s18, 0
      %p133 = por %p131, %p132
      %p134 = scmp.ne.s32.totalorder %s120, %s121
      %p135 = scmp.eq.s32.totalorder %s19, 1
      %p136 = por %p134, %p135
      %p138 = scmp.ne.s32.totalorder %s121, %s137
      %p139 = scmp.eq.s32.totalorder %s19, 0
      %p140 = por %p138, %p139
      %p141 = scmp.le.s32.totalorder 1, %s13
      %p142 = scmp.lt.s32.totalorder %s13, 3
      %p143 = pnand %p141, %p142
      %p144 = pneg %p143
      // Predicated region
      $region9: #{tpu_custom_call.1} parent=5 // pred_check
        _
      $region10: #{tpu_custom_call.1} parent=5 // pred_check_branch
        %146 = sbr.rel (%p143) target = $region12
      $region11: #{tpu_custom_call.1} parent=5 // pred_region
        %s147 = ssub.s32 %s13, 1
        // Predicated region
        $region13: #{tpu_custom_call.1} parent=11 // pred_check
          %p148 = pneg %p86
        $region14: #{tpu_custom_call.1} parent=11 // pred_check_branch
          %150 = sbr.rel (%p148) target = $region16
        $region15: #{tpu_custom_call.1} parent=11 // pred_region
          _
        $region16: #{tpu_custom_call.1} parent=11 // pred_fallthru
          _
        // Predicated region
        $region17: #{tpu_custom_call.1} parent=11 // pred_check
          %p151 = pneg %p107
        $region18: #{tpu_custom_call.1} parent=11 // pred_check_branch
          %153 = sbr.rel (%p151) target = $region20
        $region19: #{tpu_custom_call.1} parent=11 // pred_region
          _
        $region20: #{tpu_custom_call.1} parent=11 // pred_fallthru
          _
      $region12: #{tpu_custom_call.1} parent=5 // pred_fallthru
        _
      %p154 = scmp.lt.s32.totalorder %s13, 2
      // Predicated region
      $region21: #{tpu_custom_call.1} parent=5 // pred_check
        %p155 = pneg %p154
      $region22: #{tpu_custom_call.1} parent=5 // pred_check_branch
        %157 = sbr.rel (%p155) target = $region24
      $region23: #{tpu_custom_call.1} parent=5 // pred_region
        // Predicated region
        $region25: #{tpu_custom_call.1} parent=23 // pred_check
          %p158 = pneg %p33
        $region26: #{tpu_custom_call.1} parent=23 // pred_check_branch
          %160 = sbr.rel (%p158) target = $region28
        $region27: #{tpu_custom_call.1} parent=23 // pred_region
          %p161 = scmp.lt.s32.totalorder %s13, 1
          %s162 = scalar_select %p161, %s13, 1
          %s163 = smul.addr %s162, 8
          %s164 = scalar_lea.vmem %s0, %s163
        $region28: #{tpu_custom_call.1} parent=23 // pred_fallthru
          _
        // Predicated region
        $region29: #{tpu_custom_call.1} parent=23 // pred_check
          %p165 = pneg %p59
        $region30: #{tpu_custom_call.1} parent=23 // pred_check_branch
          %167 = sbr.rel (%p165) target = $region32
        $region31: #{tpu_custom_call.1} parent=23 // pred_region
          %p168 = scmp.lt.s32.totalorder %s13, 1
          %s169 = scalar_select %p168, %s13, 1
          %s170 = smul.addr %s169, 8
          %s171 = scalar_lea.vmem %s1, %s170
        $region32: #{tpu_custom_call.1} parent=23 // pred_fallthru
          _
      $region24: #{tpu_custom_call.1} parent=5 // pred_fallthru
        _
      %p172 = scmp.le.s32.totalorder 1, %s13
      %p173 = scmp.lt.s32.totalorder %s13, 3
      %p174 = pnand %p172, %p173
      %p175 = pneg %p174
      // Predicated region
      $region33: #{tpu_custom_call.1} parent=5 // pred_check
        _
      $region34: #{tpu_custom_call.1} parent=5 // pred_check_branch
        %177 = sbr.rel (%p174) target = $region36
      $region35: #{tpu_custom_call.1} parent=5 // pred_region
        %s178 = ssub.s32 %s13, 1
        %p179 = scmp.lt.s32.totalorder %s18, 1
        %s180 = scalar_select %p179, %s18, 1
        %s181 = smul.addr %s180, 8
        %s182 = scalar_lea.vmem %s0, %s181
        %p183 = pneg %p39
        %p184 = pneg %p36
        %p185 = scmp.lt.s32.totalorder %s18, 1
        %s186 = scalar_select %p185, %s18, 1
        %s187 = smul.addr %s186, 8
        %s188 = scalar_lea.vmem %s1, %s187
        %p189 = pneg %p65
        %p190 = pneg %p62
        %p191 = pneg %p86
        %p192 = pneg %p83
        %p193 = pneg %p107
        %p194 = pneg %p104
        %p195 = pneg %p133
        %p196 = pneg %p130
        %s197 = sand.u32 %s120, 1
        %s198 = scalar_lea.sflag [#allocation3], %s197
        %s199 = sand.u32 %s120, 1
        %s200 = smul.addr %s199, 8
        %s201 = scalar_lea.vmem [#allocation2], %s200
        %p202 = scmp.lt.s32.totalorder %s18, 1
        %s203 = scalar_select %p202, %s18, 1
        %s204 = smul.addr %s203, 8
        %s205 = scalar_lea.vmem %s0, %s204
        %p206 = scmp.lt.s32.totalorder %s18, 1
        %s207 = scalar_select %p206, %s18, 1
        %s208 = smul.addr %s207, 8
        %s209 = scalar_lea.vmem %s1, %s208
        %v210 = vld [vmem:[%s205] sm:$0xff]
        %v211 = vld [vmem:[%s2] sm:$0xff]
        %v212 = vld [vmem:[%s2 + $0x8] sm:$0xf]
        %v213 = vld [vmem:[%s209] sm:$0xff]
        %v214 = vlaneseq
        %v215 = vand.u32 %v214, 127
        %216 = vset.pattern.permute.xlu0 0
        %217 = vperm.xlu0 %216, %v213
        %v218 = vpop.permute.xlu0 %217
        %vm219 = vcmp.eq.s32.totalorder %v218, %v215
        %220 = vset.pattern.permute.xlu0 1
        %221 = vperm.xlu0 %220, %v213
        %v222 = vpop.permute.xlu0 %221
        %vm223 = vcmp.eq.s32.totalorder %v222, %v215
        %vm224 = vmor %vm219, %vm223
        %225 = vset.pattern.permute.xlu0 2
        %226 = vperm.xlu0 %225, %v213
        %v227 = vpop.permute.xlu0 %226
        %vm228 = vcmp.eq.s32.totalorder %v227, %v215
        %vm229 = vmor %vm224, %vm228
        %230 = vset.pattern.permute.xlu0 3
        %231 = vperm.xlu0 %230, %v213
        %v232 = vpop.permute.xlu0 %231
        %vm233 = vcmp.eq.s32.totalorder %v232, %v215
        %vm234 = vmor %vm229, %vm233
        %v235 = vsel %vm234, 1, 0
        %v236 = vcvt.s32.f32 %v235
        %v237 = vld [vmem:[%s3] sm:$0xff]
        %v238 = vld [vmem:[%s3 + $0x8] sm:$0xff]
        %v239 = vld [vmem:[%s3 + $0x10] sm:$0xff]
        %v240 = vld [vmem:[%s3 + $0x18] sm:$0xff]
        %v241 = vld [vmem:[%s3 + $0x20] sm:$0xff]
        %v242 = vld [vmem:[%s3 + $0x28] sm:$0xff]
        %v243 = vld [vmem:[%s3 + $0x30] sm:$0xff]
        %v244 = vld [vmem:[%s3 + $0x38] sm:$0xff]
        %v245 = vld [vmem:[%s3 + $0x40] sm:$0xff]
        %v246 = vld [vmem:[%s3 + $0x48] sm:$0xff]
        %v247 = vld [vmem:[%s3 + $0x50] sm:$0xff]
        %v248 = vld [vmem:[%s3 + $0x58] sm:$0xff]
        %v249 = vld [vmem:[%s3 + $0x60] sm:$0xff]
        %v250 = vld [vmem:[%s3 + $0x68] sm:$0xff]
        %v251 = vld [vmem:[%s3 + $0x70] sm:$0xff]
        %v252 = vld [vmem:[%s3 + $0x78] sm:$0xff]
        %253 = vmatprep.subr.mxu0 0.0
        %254 = vmatpush1.msra.mxu0 %v252
        %255 = vmatprep.subr.mxu0 0.0
        %256 = vmatpush1.msra.mxu0 %v251
        %257 = vmatprep.subr.mxu0 0.0
        %258 = vmatpush1.msra.mxu0 %v250
        %259 = vmatprep.subr.mxu0 0.0
        %260 = vmatpush1.msra.mxu0 %v249
        %261 = vmatprep.subr.mxu0 0.0
        %262 = vmatpush1.msra.mxu0 %v248
        %263 = vmatprep.subr.mxu0 0.0
        %264 = vmatpush1.msra.mxu0 %v247
        %265 = vmatprep.subr.mxu0 0.0
        %266 = vmatpush1.msra.mxu0 %v246
        %267 = vmatprep.subr.mxu0 0.0
        %268 = vmatpush1.msra.mxu0 %v245
        %269 = vmatprep.subr.mxu0 0.0
        %270 = vmatpush1.msra.mxu0 %v244
        %271 = vmatprep.subr.mxu0 0.0
        %272 = vmatpush1.msra.mxu0 %v243
        %273 = vmatprep.subr.mxu0 0.0
        %274 = vmatpush1.msra.mxu0 %v242
        %275 = vmatprep.subr.mxu0 0.0
        %276 = vmatpush1.msra.mxu0 %v241
        %277 = vmatprep.subr.mxu0 0.0
        %278 = vmatpush1.msra.mxu0 %v240
        %279 = vmatprep.subr.mxu0 0.0
        %280 = vmatpush1.msra.mxu0 %v239
        %281 = vmatprep.subr.mxu0 0.0
        %282 = vmatpush1.msra.mxu0 %v238
        %283 = vmatprep.subr.mxu0 0.0
        %284 = vmatpush1.msra.mxu0 %v237
        %285 = vmatprep.subr.mxu0 0.0
        %286 = vmatpush2.msra.mxu0 0.0
        %287 = vmatprep.subr.mxu0 0.0
        %288 = vmatpush2.msra.mxu0 0.0
        %289 = vmatprep.subr.mxu0 0.0
        %290 = vmatpush2.msra.mxu0 0.0
        %291 = vmatprep.subr.mxu0 0.0
        %292 = vmatpush2.msra.mxu0 0.0
        %293 = vmatprep.subr.mxu0 0.0
        %294 = vmatpush2.msra.mxu0 0.0
        %295 = vmatprep.subr.mxu0 0.0
        %296 = vmatpush2.msra.mxu0 0.0
        %297 = vmatprep.subr.mxu0 0.0
        %298 = vmatpush2.msra.mxu0 0.0
        %299 = vmatprep.subr.mxu0 0.0
        %300 = vmatpush2.msra.mxu0 0.0
        %301 = vmatprep.subr.mxu0 0.0
        %302 = vmatpush2.msra.mxu0 0.0
        %303 = vmatprep.subr.mxu0 0.0
        %304 = vmatpush2.msra.mxu0 0.0
        %305 = vmatprep.subr.mxu0 0.0
        %306 = vmatpush2.msra.mxu0 0.0
        %307 = vmatprep.subr.mxu0 0.0
        %308 = vmatpush2.msra.mxu0 0.0
        %309 = vmatprep.subr.mxu0 0.0
        %310 = vmatpush2.msra.mxu0 0.0
        %311 = vmatprep.subr.mxu0 0.0
        %312 = vmatpush2.msra.mxu0 0.0
        %313 = vmatprep.subr.mxu0 0.0
        %314 = vmatpush2.msra.mxu0 0.0
        %315 = vmatprep.subr.mxu0 0.0
        %316 = vmatpush2.msra.mxu0 0.0
        %317 = vmatprep.mubr.f32.mxu0 0.0
        %318 = vmatmul.mubr.f32.gmra.mxu0 %v236
        %v319 = vpop.f32.mrf.mxu0
        %v320 = vadd.f32 0.0, %v319
        %v321 = vpop.f32.mrf.mxu0
        %322 = vdwg.mxu0
        %vm323 = vcmask 97280
        %v325 = vsel %vm323, %v210, 0
        %vm327 = vcmask 1043456
        %v329 = vsel %vm327, %v212, 0
        %331 = vmatprep.subr.mxu0 0.0
        %332 = vmatpush1.msra.mxu0 0.0
        %333 = vmatprep.subr.mxu0 0.0
        %334 = vmatpush1.msra.mxu0 0.0
        %335 = vmatprep.subr.mxu0 0.0
        %336 = vmatpush1.msra.mxu0 0.0
        %337 = vmatprep.subr.mxu0 0.0
        %338 = vmatpush1.msra.mxu0 0.0
        %339 = vmatprep.subr.mxu0 0.0
        %340 = vmatpush1.msra.mxu0 0.0
        %341 = vmatprep.subr.mxu0 0.0
        %342 = vmatpush1.msra.mxu0 0.0
        %343 = vmatprep.subr.mxu0 0.0
        %344 = vmatpush1.msra.mxu0 0.0
        %345 = vmatprep.subr.mxu0 0.0
        %346 = vmatpush1.msra.mxu0 0.0
        %347 = vmatprep.subr.mxu0 0.0
        %348 = vmatpush1.msra.mxu0 0.0
        %349 = vmatprep.subr.mxu0 0.0
        %350 = vmatpush1.msra.mxu0 0.0
        %351 = vmatprep.subr.mxu0 0.0
        %352 = vmatpush1.msra.mxu0 0.0
        %353 = vmatprep.subr.mxu0 0.0
        %354 = vmatpush1.msra.mxu0 0.0
        %355 = vmatprep.subr.mxu0 0.0
        %356 = vmatpush1.msra.mxu0 0.0
        %357 = vmatprep.subr.mxu0 0.0
        %358 = vmatpush1.msra.mxu0 0.0
        %359 = vmatprep.subr.mxu0 0.0
        %360 = vmatpush1.msra.mxu0 %v329
        %361 = vmatprep.subr.mxu0 0.0
        %362 = vmatpush1.msra.mxu0 %v211
        %363 = vmatprep.subr.mxu0 0.0
        %364 = vmatpush2.msra.mxu0 0.0
        %365 = vmatprep.subr.mxu0 0.0
        %366 = vmatpush2.msra.mxu0 0.0
        %367 = vmatprep.subr.mxu0 0.0
        %368 = vmatpush2.msra.mxu0 0.0
        %369 = vmatprep.subr.mxu0 0.0
        %370 = vmatpush2.msra.mxu0 0.0
        %371 = vmatprep.subr.mxu0 0.0
        %372 = vmatpush2.msra.mxu0 0.0
        %373 = vmatprep.subr.mxu0 0.0
        %374 = vmatpush2.msra.mxu0 0.0
        %375 = vmatprep.subr.mxu0 0.0
        %376 = vmatpush2.msra.mxu0 0.0
        %377 = vmatprep.subr.mxu0 0.0
        %378 = vmatpush2.msra.mxu0 0.0
        %379 = vmatprep.subr.mxu0 0.0
        %380 = vmatpush2.msra.mxu0 0.0
        %381 = vmatprep.subr.mxu0 0.0
        %382 = vmatpush2.msra.mxu0 0.0
        %383 = vmatprep.subr.mxu0 0.0
        %384 = vmatpush2.msra.mxu0 0.0
        %385 = vmatprep.subr.mxu0 0.0
        %386 = vmatpush2.msra.mxu0 0.0
        %387 = vmatprep.subr.mxu0 0.0
        %388 = vmatpush2.msra.mxu0 0.0
        %389 = vmatprep.subr.mxu0 0.0
        %390 = vmatpush2.msra.mxu0 0.0
        %391 = vmatprep.subr.mxu0 0.0
        %392 = vmatpush2.msra.mxu0 0.0
        %393 = vmatprep.subr.mxu0 0.0
        %394 = vmatpush2.msra.mxu0 0.0
        %395 = vmatprep.mubr.f32.mxu0 0.0
        %396 = vmatmul.mubr.f32.gmra.mxu0 %v325
        %v397 = vpop.f32.mrf.mxu0
        %v398 = vadd.f32 %v320, %v397
        %v399 = vpop.f32.mrf.mxu0
        %400 = vdwg.mxu0
        %vm401 = vcmask 261120
        %402 = vst.msk [vmem:[%s201] sm:$0xff] %vm401, %v398
        %s403 = sand.u32 %s120, 1
        %s404 = scalar_lea.sflag [#allocation3], %s403
        %s405 = sand.u32 %s120, 1
        %s406 = smul.addr %s405, 8
        %s407 = scalar_lea.vmem [#allocation2], %s406
        // Predicated region
        $region37: #{tpu_custom_call.1} parent=35 // pred_check
          %p408 = pneg %p130
        $region38: #{tpu_custom_call.1} parent=35 // pred_check_branch
          %410 = sbr.rel (%p408) target = $region40
        $region39: #{tpu_custom_call.1} parent=35 // pred_region
          %s412 = ssub.s32 128, 128
          %413 = vsyncadd %s404, %s412
          %s414 = smul.addr %s18, 128
          %s415 = scalar_lea.hbm %s4, %s414
          %s417 = sshll.u32 %s407, 4
          %s418 = int_to_ptr.vmem [resolvable:$true] %s417
          %420 = dma.vmem_to_hbm [thread:$0]  %s418, 128, %s415, %s404
        $region40: #{tpu_custom_call.1} parent=35 // pred_fallthru
          _
      $region36: #{tpu_custom_call.1} parent=5 // pred_fallthru
        _
      %p421 = scmp.le.s32.totalorder 2, %s13
      // Predicated region
      $region41: #{tpu_custom_call.1} parent=5 // pred_check
        %p422 = pneg %p421
      $region42: #{tpu_custom_call.1} parent=5 // pred_check_branch
        %424 = sbr.rel (%p422) target = $region44
      $region43: #{tpu_custom_call.1} parent=5 // pred_region
        %s425 = ssub.s32 %s13, 2
        // Predicated region
        $region45: #{tpu_custom_call.1} parent=43 // pred_check
          %p426 = pneg %p136
        $region46: #{tpu_custom_call.1} parent=43 // pred_check_branch
          %428 = sbr.rel (%p426) target = $region48
        $region47: #{tpu_custom_call.1} parent=43 // pred_region
          %s429 = sand.u32 %s121, 1
          %s430 = scalar_lea.sflag [#allocation3], %s429
          %s431 = sand.u32 %s121, 1
          %s432 = smul.addr %s431, 8
          %s433 = scalar_lea.vmem [#allocation2], %s432
          %434 = dma.done %s430, 128
        $region48: #{tpu_custom_call.1} parent=43 // pred_fallthru
          _
      $region44: #{tpu_custom_call.1} parent=5 // pred_fallthru
        _
    $region6: #{tpu_custom_call.1} parent=1 // loop_footer
      %s17 = sadd.s32 1, %s13
    $region7: #{tpu_custom_call.1} parent=1 // loop_footer_branch
      %12 = sbr.rel target = $region3
    $region8: #{tpu_custom_call.1} parent=1 // loop_exit
      _
    %435 = vsyncpa [#allocation3], 1
    %s436 = scalar_lea.sflag [#allocation3], 1
    %437 = vsyncpa %s436, 1

</llo_original>
